<compile_context>
chip_gen: v7x
topology: tpu7x:2x2x1
jax: 0.10.0
libtpu: 0.0.40
codegen_flags: <defaults>
</compile_context>

<pallas_src>
import functools

import jax
import jax.numpy as jnp
from jax.experimental import pallas as pl
from jax.experimental.pallas import tpu as pltpu


def _pconv_kernel(w_ref, b_ref, x_ref, o_ref):
    # w_ref: (C,)  f32 SMEM        -- 1x1 conv weights (single output channel)
    # b_ref: (1,)  f32 SMEM        -- conv bias
    # x_ref: (1, C, tR, L) VMEM    -- one (image, row-tile) block, all channels
    # o_ref: (1, 1, tR, L) VMEM    -- conv result (channel 0 only; channels
    #                                 1..C-1 are the untouched aliased input)
    C = x_ref.shape[1]
    acc = x_ref[0, 0].astype(jnp.float32) * w_ref[0]
    for c in range(1, C):  # C is small & static: unrolled VPU mul/adds
        acc = acc + x_ref[0, c].astype(jnp.float32) * w_ref[c]
    o_ref[0, 0] = (acc + b_ref[0]).astype(o_ref.dtype)


def _vmem_capacity_bytes():
    try:
        return int(pltpu.get_tpu_info().vmem_capacity_bytes)
    except Exception:
        return 128 << 20  # v5e/v6e default


def _pick_tile_rows(n_rows, n_chan, lane, itemsize, *, target_bytes, min_tiles=1):
    """Largest row tile that (a) divides n_rows, (b) honors sublane packing,
    (c) keeps the input block <= target_bytes, (d) leaves >= min_tiles tiles."""
    step = max(8, 8 * (4 // itemsize))  # 8 (f32), 16 (bf16/fp16), 32 (int8/fp8)
    if n_rows <= step:
        return n_rows
    row_bytes = n_chan * lane * itemsize

    def largest_divisor(align, upper):
        best = 0
        for t in range(align, min(n_rows, upper) + 1, align):
            if n_rows % t == 0:
                best = t
        return best

    budget_rows = max(step, target_bytes // row_bytes)
    split_rows = max(step, n_rows // max(1, min_tiles))
    t = largest_divisor(step, min(budget_rows, split_rows))
    if t:
        return t
    # No packing-aligned divisor under the budget: relax alignment to 8 and
    # allow blocks up to a hard VMEM-safe cap (8 MiB) before full extent.
    t = largest_divisor(8, max(8, (8 << 20) // row_bytes))
    if t:
        return t
    # TODO(synk): n_rows has no multiple-of-8 divisor at all; the full-extent
    # block is layout-legal but could exceed scoped VMEM for extreme shapes.
    return n_rows


def _pconv_call(x4, w32, b32, *, tile_rows, in_buffers, vmem_limit_bytes):
    N, C, R, L = x4.shape
    itemsize = jnp.dtype(x4.dtype).itemsize

    x_idx = lambda n, r: (n, 0, r, 0)
    if in_buffers != 2:
        try:
            x_spec = pl.BlockSpec((1, C, tile_rows, L), x_idx,
                                  pipeline_mode=pl.Buffered(in_buffers))
        except TypeError:  # jax build without pipeline_mode: default 2-deep
            x_spec = pl.BlockSpec((1, C, tile_rows, L), x_idx)
    else:
        x_spec = pl.BlockSpec((1, C, tile_rows, L), x_idx)

    return pl.pallas_call(
        _pconv_kernel,
        out_shape=jax.ShapeDtypeStruct((N, C, R, L), x4.dtype),
        grid_spec=pltpu.PrefetchScalarGridSpec(
            num_scalar_prefetch=0,
            grid=(N, R // tile_rows),
            in_specs=[
                pl.BlockSpec(memory_space=pltpu.MemorySpace.SMEM),  # weight (C,)
                pl.BlockSpec(memory_space=pltpu.MemorySpace.SMEM),  # bias (1,)
                x_spec,
            ],
            out_specs=pl.BlockSpec((1, 1, tile_rows, L),
                                   lambda n, r: (n, 0, r, 0)),
        ),
        input_output_aliases={2: 0},  # x buffer is reused as the output buffer
        compiler_params=pltpu.CompilerParams(
            dimension_semantics=("parallel", "parallel"),
            vmem_limit_bytes=vmem_limit_bytes),
        cost_estimate=pl.CostEstimate(
            flops=2 * N * C * R * L,
            transcendentals=0,
            bytes_accessed=(C + 1) * N * R * L * itemsize),
    )(w32, b32, x4)


@functools.partial(jax.jit, donate_argnums=(0,))
def pconv(x, weight, bias):
    """x: (N, C, H, W); weight: (C,) (or any shape reshapable to it); bias: (1,).

    NOTE: x is donated and aliased into the output -- do not reuse x after the
    call. If donation cannot be honored, XLA inserts a copy (results stay
    correct, but the write-only-channel-0 bandwidth win is lost).
    """
    N, C, H, W = x.shape
    HW = H * W
    itemsize = jnp.dtype(x.dtype).itemsize
    w32 = weight.reshape(-1).astype(jnp.float32)
    b32 = bias.reshape(-1).astype(jnp.float32)

    if HW % 128 == 0:
        # Lane-dense view: each channel slab is (HW/128, 128).
        R, L = HW // 128, 128
        x4 = x.reshape(N, C, R, L)
    else:
        # Ragged HW: keep the natural layout and tile over H with full-W lanes.
        R, L = H, W
        x4 = x

    # Per-generation tile budget: v7x (<=64 MiB VMEM, ~3.2 TB/s HBM) prefers
    # bigger blocks with default buffering; v5e/v6e (128 MiB VMEM) take 4 MiB
    # blocks with 3-deep input pipelining.
    if _vmem_capacity_bytes() <= (96 << 20):
        target_bytes, in_buffers = 8 << 20, 2
    else:
        target_bytes, in_buffers = 4 << 20, 3

    min_tiles = 2 if N == 1 else 1  # keep both v7x TensorCores busy when N == 1
    tile_rows = _pick_tile_rows(R, C, L, itemsize,
                                target_bytes=target_bytes, min_tiles=min_tiles)
    if N * (R // tile_rows) < max(2, in_buffers):
        in_buffers = 2  # tiny grids: default double-buffering is plenty

    blk_in = C * tile_rows * L * itemsize
    blk_out = tile_rows * L * itemsize
    vmem_limit = in_buffers * blk_in + 2 * blk_out + (4 << 20)
    vmem_limit = int(min(max(vmem_limit, 32 << 20), 64 << 20))

    out4 = _pconv_call(x4, w32, b32, tile_rows=tile_rows,
                       in_buffers=in_buffers, vmem_limit_bytes=vmem_limit)
    return out4.reshape(N, C, H, W)


if __name__ == "__main__":
    n_feat = 4
    N, H, W = 2, 16, 16

    # Deterministic params matching PConv.init_weights():
    #   conv.weight = 1 / n_feat everywhere, conv.bias = 0
    weight = jnp.full((n_feat,), 1.0 / n_feat, dtype=jnp.float32)
    bias = jnp.zeros((1,), dtype=jnp.float32)

    key = jax.random.PRNGKey(0)
    x = jax.random.normal(key, (N, n_feat, H, W), dtype=jnp.float32)

    # Reference (plain JAX), computed BEFORE the kernel call since x is donated:
    # channel 0 = 1x1 conv (= channel mean here), channels 1.. = passthrough.
    conv_ref = (x * weight[None, :, None, None]).sum(axis=1, keepdims=True) + bias[0]
    ref = jnp.concatenate([conv_ref, x[:, 1:]], axis=1)
    ref = jax.block_until_ready(ref)

    out = pconv(x, weight, bias)  # donates x
    out = jax.block_until_ready(out)

    assert out.shape == (N, n_feat, H, W)
    assert jnp.allclose(out, ref, atol=1e-5, rtol=1e-5)

    print("KERNEL_OK")
</pallas_src>

<mosaic_0001>
module attributes {stable_mosaic.version = 11 : i64} {
  func.func @_pconv_kernel(%arg0: i32, %arg1: i32, %arg2: memref<4xf32, #tpu.memory_space<smem>>, %arg3: memref<1xf32, #tpu.memory_space<smem>>, %arg4: memref<1x4x2x128xf32, #tpu.memory_space<vmem>>, %arg5: memref<1x1x2x128xf32, #tpu.memory_space<vmem>>) attributes {dimension_semantics = [#tpu.dimension_semantics<parallel>, #tpu.dimension_semantics<parallel>], iteration_bounds = array<i64: 2, 1>, scalar_prefetch = 0 : i64, scratch_operands = 0 : i64, tpu.core_type = #tpu.core_type<tc>, window_params = [{transform_indices = @transform_0, window_bounds = array<i64: 4>}, {transform_indices = @transform_1, window_bounds = array<i64: 1>}, {transform_indices = @transform_2, window_bounds = array<i64: 1, 4, 2, 128>}, {transform_indices = @transform_3, window_bounds = array<i64: 1, 1, 2, 128>}]} {
    %c0 = arith.constant 0 : index
    %c0_0 = arith.constant 0 : index
    %c0_1 = arith.constant 0 : index
    %c0_2 = arith.constant 0 : index
    %0 = vector.load %arg4[%c0, %c0_0, %c0_1, %c0_2] : memref<1x4x2x128xf32, #tpu.memory_space<vmem>>, vector<1x1x2x128xf32>
    %1 = vector.shape_cast %0 : vector<1x1x2x128xf32> to vector<2x128xf32>
    %c0_3 = arith.constant 0 : index
    %2 = memref.load %arg2[%c0_3] : memref<4xf32, #tpu.memory_space<smem>>
    %3 = vector.broadcast %2 : f32 to vector<2x128xf32>
    %4 = arith.mulf %1, %3 : vector<2x128xf32>
    %c0_4 = arith.constant 0 : index
    %c1 = arith.constant 1 : index
    %c0_5 = arith.constant 0 : index
    %c0_6 = arith.constant 0 : index
    %5 = vector.load %arg4[%c0_4, %c1, %c0_5, %c0_6] : memref<1x4x2x128xf32, #tpu.memory_space<vmem>>, vector<1x1x2x128xf32>
    %6 = vector.shape_cast %5 : vector<1x1x2x128xf32> to vector<2x128xf32>
    %c1_7 = arith.constant 1 : index
    %7 = memref.load %arg2[%c1_7] : memref<4xf32, #tpu.memory_space<smem>>
    %8 = vector.broadcast %7 : f32 to vector<2x128xf32>
    %9 = arith.mulf %6, %8 : vector<2x128xf32>
    %10 = arith.addf %4, %9 : vector<2x128xf32>
    %c0_8 = arith.constant 0 : index
    %c2 = arith.constant 2 : index
    %c0_9 = arith.constant 0 : index
    %c0_10 = arith.constant 0 : index
    %11 = vector.load %arg4[%c0_8, %c2, %c0_9, %c0_10] : memref<1x4x2x128xf32, #tpu.memory_space<vmem>>, vector<1x1x2x128xf32>
    %12 = vector.shape_cast %11 : vector<1x1x2x128xf32> to vector<2x128xf32>
    %c2_11 = arith.constant 2 : index
    %13 = memref.load %arg2[%c2_11] : memref<4xf32, #tpu.memory_space<smem>>
    %14 = vector.broadcast %13 : f32 to vector<2x128xf32>
    %15 = arith.mulf %12, %14 : vector<2x128xf32>
    %16 = arith.addf %10, %15 : vector<2x128xf32>
    %c0_12 = arith.constant 0 : index
    %c3 = arith.constant 3 : index
    %c0_13 = arith.constant 0 : index
    %c0_14 = arith.constant 0 : index
    %17 = vector.load %arg4[%c0_12, %c3, %c0_13, %c0_14] : memref<1x4x2x128xf32, #tpu.memory_space<vmem>>, vector<1x1x2x128xf32>
    %18 = vector.shape_cast %17 : vector<1x1x2x128xf32> to vector<2x128xf32>
    %c3_15 = arith.constant 3 : index
    %19 = memref.load %arg2[%c3_15] : memref<4xf32, #tpu.memory_space<smem>>
    %20 = vector.broadcast %19 : f32 to vector<2x128xf32>
    %21 = arith.mulf %18, %20 : vector<2x128xf32>
    %22 = arith.addf %16, %21 : vector<2x128xf32>
    %c0_16 = arith.constant 0 : index
    %23 = memref.load %arg3[%c0_16] : memref<1xf32, #tpu.memory_space<smem>>
    %24 = vector.broadcast %23 : f32 to vector<2x128xf32>
    %25 = arith.addf %22, %24 : vector<2x128xf32>
    %c0_17 = arith.constant 0 : index
    %c0_18 = arith.constant 0 : index
    %c0_19 = arith.constant 0 : index
    %c0_20 = arith.constant 0 : index
    %26 = vector.load %arg5[%c0_17, %c0_18, %c0_19, %c0_20] : memref<1x1x2x128xf32, #tpu.memory_space<vmem>>, vector<1x1x2x128xf32>
    %27 = vector.shape_cast %26 : vector<1x1x2x128xf32> to vector<2x128xf32>
    %28 = vector.shape_cast %25 : vector<2x128xf32> to vector<1x1x2x128xf32>
    tpu.vector_store %arg5[%c0_17, %c0_18, %c0_19, %c0_20], %28 {strides = array<i32>} : memref<1x1x2x128xf32, #tpu.memory_space<vmem>>, vector<1x1x2x128xf32>,
    return
  }
  func.func @transform_0(%arg0: i32, %arg1: i32) -> i32 {
    %c0_i32 = arith.constant 0 : i32
    %c0_i32_0 = arith.constant 0 : i32
    return %c0_i32 : i32
  }
  func.func @transform_1(%arg0: i32, %arg1: i32) -> i32 {
    %c0_i32 = arith.constant 0 : i32
    %c0_i32_0 = arith.constant 0 : i32
    return %c0_i32 : i32
  }
  func.func @transform_2(%arg0: i32, %arg1: i32) -> (i32, i32, i32, i32) {
    %c0_i32 = arith.constant 0 : i32
    %c0_i32_0 = arith.constant 0 : i32
    %c0_i32_1 = arith.constant 0 : i32
    return %arg0, %c0_i32, %arg1, %c0_i32_0 : i32, i32, i32, i32
  }
  func.func @transform_3(%arg0: i32, %arg1: i32) -> (i32, i32, i32, i32) {
    %c0_i32 = arith.constant 0 : i32
    %c0_i32_0 = arith.constant 0 : i32
    %c0_i32_1 = arith.constant 0 : i32
    return %arg0, %c0_i32, %arg1, %c0_i32_0 : i32, i32, i32, i32
  }
}

</mosaic_0001>

<llo_original>
// kernel: pconv.1
$region0: #{pconv.1}
  #allocation0 [shape = 'u32[]', space=smem, size = 0x4, offset = 0x4, fixed_abs, tag = 'smem constant byte address 0x4 - core index']
  #allocation1 [shape = 'u32[144,128]{1,0:T(1,128)}', space=vmem, size = 0x12000, scoped, tag = 'internal scratch']
  #allocation2 [shape = 'f32[1]{0:T(128)S(6)}', space=smem, size = 0x200, scoped, tag = 'scoped memory for pconv.1']
  %s0 = inlined_call_operand.vmem [shape: f32[4], index: 0, kind: input, shape index: {}]
  %s1 = inlined_call_operand.<no memory space> [shape: f32[1], index: 1, kind: input, shape index: {}]
  %s2 = inlined_call_operand.vmem [shape: f32[2,4,2,128], index: 2, kind: input, shape index: {}, may-alias: {2,3}]
  %s3 = inlined_call_operand.vmem [shape: f32[2,4,2,128], index: 3, kind: output, shape index: {}, may-alias: {2,3}]
  %s4 = sld [smem:[#allocation0]]
  $region49: #{pconv.1} parent=0
    _
  %s6 = ssub.s32 1, %s4
  %s7 = scalar_select 0, %s6, %s4
  %8 = sst [smem:[#allocation2]] %s1
  $region1: #{pconv.1} parent=0
    #allocation3 [shape = 'u8[512]{0}', space=smem, size = 0x200, scoped, tag = 'input window, operand 0, single buffered']
    #allocation4 [shape = 's32[2]{0}', space=sflag, size = 0x8, scoped, tag = 'scoped memory for pconv.1']
    %9 = vsyncpa [#allocation4], 0
    loop: start=0, step=1, limit=4
    $region2: #{pconv.1} parent=1 // loop_pre_header
      _
    $region3: #{pconv.1} parent=1 // loop_header
      %s11 = sphi 0, %s15
      %p12 = scmp.ge.s32.totalorder %s11, 4
      %s18 = sphi 0, %s30
      %s19 = sphi 0, %s26
      %s20 = sphi 0, %s18
      %s21 = sphi 0, %s19
      %s22 = sphi 0, %s20
      %s23 = sphi 0, %s21
      %s31 = sphi 0, %s31
      %s33 = sphi 0, %s31
      %s34 = sphi 0, %s33
      %s48 = sphi 0, %s34
      %s52 = sphi 0, %s52
      %s54 = sphi 0, %s52
      %s55 = sphi 0, %s54
      %s69 = sphi 0, %s55
      %s77 = sphi 0, %s79
      %s80 = sphi 0, %s77
      %s81 = sphi 0, %s80
      %s97 = sphi 0, %s81
      %s105 = sphi 0, %s107
      %s108 = sphi 0, %s105
      %s109 = sphi 0, %s108
      %s125 = sphi 0, %s109
    $region4: #{pconv.1} parent=1 // loop_header_branch
      %14 = sbr.rel (%p12) target = $region8
    $region5: #{pconv.1} parent=1 // loop_body
      %s16 = ssub.s32 %s11, 1
      %s17 = ssub.s32 %s11, 2
      %s24 = sadd.s32 1, %s19
      %p25 = scmp.ge.s32.totalorder %s24, 1
      %s26 = scalar_select %p25, 0, %s24
      %s27 = sadd.s32 1, %s18
      %s28 = scalar_select %p25, %s27, %s18
      %p29 = scmp.ge.s32.totalorder %s28, 2
      %s30 = scalar_select %p29, 0, %s28
      %s32 = sadd.s32 %s31, 1
      %p35 = scmp.eq.s32.totalorder %s11, 1
      %p36 = scmp.ne.s32.totalorder %s31, %s33
      %p37 = scmp.eq.s32.totalorder %s11, 0
      %p38 = por %p36, %p37
      %p39 = scmp.ne.s32.totalorder %s31, %s33
      %p40 = scmp.eq.s32.totalorder %s16, 1
      %p41 = por %p39, %p40
      %p42 = scmp.ne.s32.totalorder %s33, %s34
      %p43 = scmp.eq.s32.totalorder %s16, 0
      %p44 = por %p42, %p43
      %p45 = scmp.ne.s32.totalorder %s33, %s34
      %p46 = scmp.eq.s32.totalorder %s17, 1
      %p47 = por %p45, %p46
      %p49 = scmp.ne.s32.totalorder %s34, %s48
      %p50 = scmp.eq.s32.totalorder %s17, 0
      %p51 = por %p49, %p50
      %s53 = sadd.s32 %s52, 1
      %p56 = scmp.eq.s32.totalorder %s11, 1
      %p57 = scmp.ne.s32.totalorder %s52, %s54
      %p58 = scmp.eq.s32.totalorder %s11, 0
      %p59 = por %p57, %p58
      %p60 = scmp.ne.s32.totalorder %s52, %s54
      %p61 = scmp.eq.s32.totalorder %s16, 1
      %p62 = por %p60, %p61
      %p63 = scmp.ne.s32.totalorder %s54, %s55
      %p64 = scmp.eq.s32.totalorder %s16, 0
      %p65 = por %p63, %p64
      %p66 = scmp.ne.s32.totalorder %s54, %s55
      %p67 = scmp.eq.s32.totalorder %s17, 1
      %p68 = por %p66, %p67
      %p70 = scmp.ne.s32.totalorder %s55, %s69
      %p71 = scmp.eq.s32.totalorder %s17, 0
      %p72 = por %p70, %p71
      %s73 = ssub.s32 %s18, %s30
      %s74 = ssub.s32 %s19, %s26
      %s75 = sor.u32 %s73, %s74
      %p76 = scmp.eq.s32.totalorder %s75, 0
      %s78 = sadd.s32 %s77, 1
      %s79 = scalar_select %p76, %s77, %s78
      %p82 = pneg %p76
      %p83 = scmp.eq.s32.totalorder %s11, 1
      %p84 = por %p82, %p83
      %p85 = scmp.ne.s32.totalorder %s77, %s80
      %p86 = scmp.eq.s32.totalorder %s11, 0
      %p87 = por %p85, %p86
      %p88 = scmp.ne.s32.totalorder %s77, %s80
      %p89 = scmp.eq.s32.totalorder %s16, 1
      %p90 = por %p88, %p89
      %p91 = scmp.ne.s32.totalorder %s80, %s81
      %p92 = scmp.eq.s32.totalorder %s16, 0
      %p93 = por %p91, %p92
      %p94 = scmp.ne.s32.totalorder %s80, %s81
      %p95 = scmp.eq.s32.totalorder %s17, 1
      %p96 = por %p94, %p95
      %p98 = scmp.ne.s32.totalorder %s81, %s97
      %p99 = scmp.eq.s32.totalorder %s17, 0
      %p100 = por %p98, %p99
      %s101 = ssub.s32 %s18, %s30
      %s102 = ssub.s32 %s19, %s26
      %s103 = sor.u32 %s101, %s102
      %p104 = scmp.eq.s32.totalorder %s103, 0
      %s106 = sadd.s32 %s105, 1
      %s107 = scalar_select %p104, %s105, %s106
      %p110 = pneg %p104
      %p111 = scmp.eq.s32.totalorder %s11, 1
      %p112 = por %p110, %p111
      %p113 = scmp.ne.s32.totalorder %s105, %s108
      %p114 = scmp.eq.s32.totalorder %s11, 0
      %p115 = por %p113, %p114
      %p116 = scmp.ne.s32.totalorder %s105, %s108
      %p117 = scmp.eq.s32.totalorder %s16, 1
      %p118 = por %p116, %p117
      %p119 = scmp.ne.s32.totalorder %s108, %s109
      %p120 = scmp.eq.s32.totalorder %s16, 0
      %p121 = por %p119, %p120
      %p122 = scmp.ne.s32.totalorder %s108, %s109
      %p123 = scmp.eq.s32.totalorder %s17, 1
      %p124 = por %p122, %p123
      %p126 = scmp.ne.s32.totalorder %s109, %s125
      %p127 = scmp.eq.s32.totalorder %s17, 0
      %p128 = por %p126, %p127
      %p129 = scmp.le.s32.totalorder 1, %s11
      %p130 = scmp.lt.s32.totalorder %s11, 3
      %p131 = pnand %p129, %p130
      %p132 = pneg %p131
      // Predicated region
      $region9: #{pconv.1} parent=5 // pred_check
        _
      $region10: #{pconv.1} parent=5 // pred_check_branch
        %134 = sbr.rel (%p131) target = $region12
      $region11: #{pconv.1} parent=5 // pred_region
        %s135 = ssub.s32 %s11, 1
        // Predicated region
        $region13: #{pconv.1} parent=11 // pred_check
          %p136 = pneg %p44
        $region14: #{pconv.1} parent=11 // pred_check_branch
          %138 = sbr.rel (%p136) target = $region16
        $region15: #{pconv.1} parent=11 // pred_region
          %s140 = ssub.s32 16, 16
          %141 = vsyncadd [#allocation4], %s140
          %s143 = sshll.u32 %s0, 4
          %s144 = int_to_ptr.vmem [resolvable:$true] %s143
          %146 = dma.vmem_to_smem %s144, 16, [#allocation3], [#allocation4]
        $region16: #{pconv.1} parent=11 // pred_fallthru
          _
        // Predicated region
        $region17: #{pconv.1} parent=11 // pred_check
          %p147 = pneg %p65
        $region18: #{pconv.1} parent=11 // pred_check_branch
          %149 = sbr.rel (%p147) target = $region20
        $region19: #{pconv.1} parent=11 // pred_region
          _
        $region20: #{pconv.1} parent=11 // pred_fallthru
          _
      $region12: #{pconv.1} parent=5 // pred_fallthru
        _
      %p150 = scmp.lt.s32.totalorder %s11, 2
      // Predicated region
      $region21: #{pconv.1} parent=5 // pred_check
        %p151 = pneg %p150
      $region22: #{pconv.1} parent=5 // pred_check_branch
        %153 = sbr.rel (%p151) target = $region24
      $region23: #{pconv.1} parent=5 // pred_region
        // Predicated region
        $region25: #{pconv.1} parent=23 // pred_check
          %p154 = pneg %p87
        $region26: #{pconv.1} parent=23 // pred_check_branch
          %156 = sbr.rel (%p154) target = $region28
        $region27: #{pconv.1} parent=23 // pred_region
          %p157 = scmp.lt.s32.totalorder %s18, 1
          %s158 = scalar_select %p157, %s18, 1
          %p159 = scmp.lt.s32.totalorder %s19, 0
          %s160 = scalar_select %p159, %s19, 0
          %s161 = smul.addr %s158, 4
          %s162 = sadd.s32 %s160, %s161
          %s163 = smul.addr %s162, 2
          %s164 = scalar_lea.vmem %s2, %s163
        $region28: #{pconv.1} parent=23 // pred_fallthru
          _
      $region24: #{pconv.1} parent=5 // pred_fallthru
        _
      %p165 = scmp.le.s32.totalorder 1, %s11
      %p166 = scmp.lt.s32.totalorder %s11, 3
      %p167 = pnand %p165, %p166
      %p168 = pneg %p167
      // Predicated region
      $region29: #{pconv.1} parent=5 // pred_check
        _
      $region30: #{pconv.1} parent=5 // pred_check_branch
        %170 = sbr.rel (%p167) target = $region32
      $region31: #{pconv.1} parent=5 // pred_region
        %s171 = ssub.s32 %s11, 1
        // Predicated region
        $region33: #{pconv.1} parent=31 // pred_check
          %p172 = pneg %p44
        $region34: #{pconv.1} parent=31 // pred_check_branch
          %174 = sbr.rel (%p172) target = $region36
        $region35: #{pconv.1} parent=31 // pred_region
          %175 = dma.done [#allocation4], 16
        $region36: #{pconv.1} parent=31 // pred_fallthru
          _
        %176 = sfence
        %p177 = pneg %p44
        %p178 = pneg %p41
        %p179 = pneg %p65
        %p180 = pneg %p62
        %p181 = scmp.lt.s32.totalorder %s20, 1
        %s182 = scalar_select %p181, %s20, 1
        %p183 = scmp.lt.s32.totalorder %s21, 0
        %s184 = scalar_select %p183, %s21, 0
        %s185 = smul.addr %s182, 4
        %s186 = sadd.s32 %s184, %s185
        %s187 = smul.addr %s186, 2
        %s188 = scalar_lea.vmem %s2, %s187
        %p189 = pneg %p93
        %p190 = pneg %p90
        %p191 = pneg %p121
        %p192 = pneg %p118
        %p193 = scmp.lt.s32.totalorder %s20, 1
        %s194 = scalar_select %p193, %s20, 1
        %p195 = scmp.lt.s32.totalorder %s21, 0
        %s196 = scalar_select %p195, %s21, 0
        %s197 = smul.addr %s194, 4
        %s198 = sadd.s32 %s196, %s197
        %s199 = smul.addr %s198, 2
        %s200 = scalar_lea.vmem %s3, %s199
        %p201 = scmp.lt.s32.totalorder %s20, 1
        %s202 = scalar_select %p201, %s20, 1
        %p203 = scmp.lt.s32.totalorder %s21, 0
        %s204 = scalar_select %p203, %s21, 0
        %s205 = smul.addr %s202, 4
        %s206 = sadd.s32 %s204, %s205
        %s207 = smul.addr %s206, 2
        %s208 = scalar_lea.vmem %s2, %s207
        %p209 = scmp.lt.s32.totalorder %s20, 1
        %s210 = scalar_select %p209, %s20, 1
        %p211 = scmp.lt.s32.totalorder %s21, 0
        %s212 = scalar_select %p211, %s21, 0
        %s213 = smul.addr %s210, 4
        %s214 = sadd.s32 %s212, %s213
        %s215 = smul.addr %s214, 2
        %s216 = scalar_lea.vmem %s3, %s215
        %v217 = vld [vmem:[%s208] sm:$0x3]
        %s218 = sld [smem:[#allocation3]]
        %v219 = vstv %s218
        %v220 = vmul.f32 %v217, %v219
        %s221 = scalar_lea.vmem %s208, 2
        %v222 = vld [vmem:[%s221] sm:$0x3]
        %s223 = sld [smem:[#allocation3 + $0x1]]
        %v224 = vstv %s223
        %v225 = vmul.f32 %v222, %v224
        %v226 = vadd.f32 %v220, %v225
        %s227 = scalar_lea.vmem %s208, 4
        %v228 = vld [vmem:[%s227] sm:$0x3]
        %s229 = sld [smem:[#allocation3 + $0x2]]
        %v230 = vstv %s229
        %v231 = vmul.f32 %v228, %v230
        %v232 = vadd.f32 %v226, %v231
        %s233 = scalar_lea.vmem %s208, 6
        %v234 = vld [vmem:[%s233] sm:$0x3]
        %s235 = sld [smem:[#allocation3 + $0x3]]
        %v236 = vstv %s235
        %v237 = vmul.f32 %v234, %v236
        %v238 = vadd.f32 %v232, %v237
        %s239 = sld [smem:[#allocation2]]
        %v240 = vstv %s239
        %v241 = vadd.f32 %v238, %v240
        %242 = vst [vmem:[%s216] sm:$0x3] %v241
        %p243 = scmp.lt.s32.totalorder %s20, 1
        %s244 = scalar_select %p243, %s20, 1
        %p245 = scmp.lt.s32.totalorder %s21, 0
        %s246 = scalar_select %p245, %s21, 0
        %s247 = smul.addr %s244, 4
        %s248 = sadd.s32 %s246, %s247
        %s249 = smul.addr %s248, 2
        %s250 = scalar_lea.vmem %s3, %s249
        // Predicated region
        $region37: #{pconv.1} parent=31 // pred_check
          %p251 = pneg %p118
        $region38: #{pconv.1} parent=31 // pred_check_branch
          %253 = sbr.rel (%p251) target = $region40
        $region39: #{pconv.1} parent=31 // pred_region
          _
        $region40: #{pconv.1} parent=31 // pred_fallthru
          _
      $region32: #{pconv.1} parent=5 // pred_fallthru
        _
      %p254 = scmp.le.s32.totalorder 2, %s11
      // Predicated region
      $region41: #{pconv.1} parent=5 // pred_check
        %p255 = pneg %p254
      $region42: #{pconv.1} parent=5 // pred_check_branch
        %257 = sbr.rel (%p255) target = $region44
      $region43: #{pconv.1} parent=5 // pred_region
        %s258 = ssub.s32 %s11, 2
        // Predicated region
        $region45: #{pconv.1} parent=43 // pred_check
          %p259 = pneg %p124
        $region46: #{pconv.1} parent=43 // pred_check_branch
          %261 = sbr.rel (%p259) target = $region48
        $region47: #{pconv.1} parent=43 // pred_region
          %p262 = scmp.lt.s32.totalorder %s22, 1
          %s263 = scalar_select %p262, %s22, 1
          %p264 = scmp.lt.s32.totalorder %s23, 0
          %s265 = scalar_select %p264, %s23, 0
          %s266 = smul.addr %s263, 4
          %s267 = sadd.s32 %s265, %s266
          %s268 = smul.addr %s267, 2
          %s269 = scalar_lea.vmem %s3, %s268
        $region48: #{pconv.1} parent=43 // pred_fallthru
          _
      $region44: #{pconv.1} parent=5 // pred_fallthru
        _
    $region6: #{pconv.1} parent=1 // loop_footer
      %s15 = sadd.s32 1, %s11
    $region7: #{pconv.1} parent=1 // loop_footer_branch
      %10 = sbr.rel target = $region3
    $region8: #{pconv.1} parent=1 // loop_exit
      _
    %270 = vsyncpa [#allocation4], 1
    %s271 = scalar_lea.sflag [#allocation4], 1
    %272 = vsyncpa %s271, 1

</llo_original>
